<compile_context>
chip_gen: v6e
topology: v6e:2x2x1
jax: 0.10.0
libtpu: 0.0.40
codegen_flags: <defaults>
</compile_context>

<pallas_src>
import functools

import jax
import jax.numpy as jnp
from jax.experimental import pallas as pl
from jax.experimental.pallas import tpu as pltpu

LANE = 128     # padded hidden width (lane dim) for the 10-wide hidden layers
SUB = 8        # sublane multiple for f32 batch padding
TM_MAX = 512   # batch tile: amortizes per-grid-step overhead, tiny VMEM footprint

IN_F, H1, H2, OUT_F = 2, 10, 10, 1


def _round_up(x, m):
    return ((x + m - 1) // m) * m


def _mlp_kernel(x_ref, w1_ref, b1_ref, w2_ref, b2_ref, w3_ref, b3_ref, o_ref):
    # x_ref: (TM, 2)          -- unpadded feature dim, minimal HBM read
    # w1_ref: (2, LANE)       -- layer-1 weights, hidden dim zero-padded to 128
    # b1_ref/b2_ref: (1, LANE)
    # w2_ref: (LANE, LANE)    -- 10x10 zero-padded to 128x128 (MXU)
    # w3_ref: (1, LANE)       -- layer-3 weights as a single lane row (w3.T padded)
    # b3_ref: (1, 1)
    # o_ref: (TM, 1)
    x = x_ref[...]

    # Layer 1 (K=2): two VPU broadcast-FMAs instead of a >90%-zero MXU matmul.
    h1 = (x[:, 0:1] * w1_ref[0:1, :]
          + x[:, 1:2] * w1_ref[1:2, :]
          + b1_ref[...])
    h1 = jnp.maximum(h1, 0.0)

    # Layer 2 (10x10, zero-padded to 128x128): MXU matmul, f32 accumulation.
    h2 = jnp.dot(h1, w2_ref[...], preferred_element_type=jnp.float32) + b2_ref[...]
    h2 = jnp.maximum(h2, 0.0)

    # Layer 3 (N=1): VPU multiply + lane reduction (XLU) -> (TM, 1).
    o = jnp.sum(h2 * w3_ref[...], axis=-1, keepdims=True) + b3_ref[...]
    o_ref[...] = o.astype(o_ref.dtype)


def _pad2(a, rows, cols):
    r, c = a.shape
    return jnp.pad(a, ((0, rows - r), (0, cols - c)))


@jax.jit
def circle_model_v1_forward(x, params):
    """x: (batch, 2) float32.  Returns logits (batch, 1) float32."""
    (w1, b1), (w2, b2), (w3, b3) = params
    batch = x.shape[0]

    # Batch tiling: tile of up to TM_MAX rows, padded batch = multiple of tile.
    bpad8 = _round_up(batch, SUB)
    tm = min(TM_MAX, bpad8)
    bpad = _round_up(bpad8, tm)
    grid_m = bpad // tm

    # Only the batch dim of x is padded; feature dim stays 2.
    x_p = jnp.pad(x.astype(jnp.float32), ((0, bpad - batch), (0, 0)))

    # Small, zero-padded weight/bias tiles (resident in VMEM across the grid).
    w1_p = _pad2(w1, IN_F, LANE)                    # (2, 128)
    b1_p = _pad2(b1.reshape(1, -1), 1, LANE)        # (1, 128)
    w2_p = _pad2(w2, LANE, LANE)                    # (128, 128)
    b2_p = _pad2(b2.reshape(1, -1), 1, LANE)        # (1, 128)
    w3_p = _pad2(w3.reshape(1, -1)[:, :H2] * 0 + w3.T, 1, LANE)  # (1, 128) == w3.T padded
    b3_p = b3.reshape(1, 1).astype(jnp.float32)     # (1, 1)

    const = lambda shape: pl.BlockSpec(shape, lambda i: (0, 0))

    out_p = pl.pallas_call(
        _mlp_kernel,
        out_shape=jax.ShapeDtypeStruct((bpad, OUT_F), jnp.float32),
        grid=(grid_m,),
        in_specs=[
            pl.BlockSpec((tm, IN_F), lambda i: (i, 0)),   # x: streamed per tile
            const((IN_F, LANE)),                          # w1
            const((1, LANE)),                             # b1
            const((LANE, LANE)),                          # w2
            const((1, LANE)),                             # b2
            const((1, LANE)),                             # w3 (as lane row)
            const((1, 1)),                                # b3
        ],
        out_specs=pl.BlockSpec((tm, OUT_F), lambda i: (i, 0)),
        compiler_params=pltpu.CompilerParams(
            dimension_semantics=("parallel",),
        ),
    )(x_p, w1_p, b1_p, w2_p, b2_p, w3_p, b3_p)

    return out_p[:batch, :]


def init_params(key):
    """Mirror torch.nn.Linear default init (U(-1/sqrt(fan_in), +1/sqrt(fan_in))).
    Weights stored as (in_features, out_features)."""
    ks = jax.random.split(key, 6)

    def linear(kw, kb, fan_in, fan_out):
        bound = 1.0 / jnp.sqrt(jnp.float32(fan_in))
        w = jax.random.uniform(kw, (fan_in, fan_out), jnp.float32, -bound, bound)
        b = jax.random.uniform(kb, (fan_out,), jnp.float32, -bound, bound)
        return w, b

    return (
        linear(ks[0], ks[1], IN_F, H1),
        linear(ks[2], ks[3], H1, H2),
        linear(ks[4], ks[5], H2, OUT_F),
    )


def _reference_forward(x, params):
    (w1, b1), (w2, b2), (w3, b3) = params
    hi = jax.lax.Precision.HIGHEST
    h = jnp.maximum(jnp.dot(x, w1, precision=hi) + b1, 0.0)
    h = jnp.maximum(jnp.dot(h, w2, precision=hi) + b2, 0.0)
    return jnp.dot(h, w3, precision=hi) + b3


if __name__ == "__main__":
    key = jax.random.PRNGKey(0)
    k_param, k_x1, k_x2 = jax.random.split(key, 3)

    params = init_params(k_param)

    # Small single-tile case (batch=8, in_features=2).
    x_small = jax.random.normal(k_x1, (8, IN_F), dtype=jnp.float32)
    logits_small = jax.block_until_ready(circle_model_v1_forward(x_small, params))
    ref_small = _reference_forward(x_small, params)
    assert logits_small.shape == (8, OUT_F), logits_small.shape
    assert jnp.allclose(logits_small, ref_small, atol=1e-4, rtol=1e-4)

    # Multi-tile case to exercise the batch grid + padding (batch=777 -> 2 tiles).
    x_big = jax.random.normal(k_x2, (777, IN_F), dtype=jnp.float32)
    logits_big = jax.block_until_ready(circle_model_v1_forward(x_big, params))
    ref_big = _reference_forward(x_big, params)
    assert logits_big.shape == (777, OUT_F), logits_big.shape
    assert jnp.allclose(logits_big, ref_big, atol=1e-4, rtol=1e-4)

    print("KERNEL_OK")
</pallas_src>

<mosaic_0001>
module attributes {stable_mosaic.version = 11 : i64} {
  func.func @_mlp_kernel(%arg0: i32, %arg1: memref<8x2xf32, #tpu.memory_space<vmem>>, %arg2: memref<2x128xf32, #tpu.memory_space<vmem>>, %arg3: memref<1x128xf32, #tpu.memory_space<vmem>>, %arg4: memref<128x128xf32, #tpu.memory_space<vmem>>, %arg5: memref<1x128xf32, #tpu.memory_space<vmem>>, %arg6: memref<1x128xf32, #tpu.memory_space<vmem>>, %arg7: memref<1x1xf32, #tpu.memory_space<vmem>>, %arg8: memref<8x1xf32, #tpu.memory_space<vmem>>) attributes {dimension_semantics = [#tpu.dimension_semantics<parallel>], iteration_bounds = array<i64: 1>, scalar_prefetch = 0 : i64, scratch_operands = 0 : i64, tpu.core_type = #tpu.core_type<tc>, window_params = [{transform_indices = @transform_0, window_bounds = array<i64: 8, 2>}, {pipeline_mode = #tpu.pipeline_mode<synchronous>, transform_indices = @transform_1, window_bounds = array<i64: 2, 128>}, {pipeline_mode = #tpu.pipeline_mode<synchronous>, transform_indices = @transform_2, window_bounds = array<i64: 1, 128>}, {pipeline_mode = #tpu.pipeline_mode<synchronous>, transform_indices = @transform_3, window_bounds = array<i64: 128, 128>}, {pipeline_mode = #tpu.pipeline_mode<synchronous>, transform_indices = @transform_4, window_bounds = array<i64: 1, 128>}, {pipeline_mode = #tpu.pipeline_mode<synchronous>, transform_indices = @transform_5, window_bounds = array<i64: 1, 128>}, {pipeline_mode = #tpu.pipeline_mode<synchronous>, transform_indices = @transform_6, window_bounds = array<i64: 1, 1>}, {transform_indices = @transform_7, window_bounds = array<i64: 8, 1>}]} {
    %c0 = arith.constant 0 : index
    %c0_0 = arith.constant 0 : index
    %0 = vector.load %arg1[%c0, %c0_0] : memref<8x2xf32, #tpu.memory_space<vmem>>, vector<8x2xf32>
    %1 = vector.extract_strided_slice %0 {offsets = [0, 0], sizes = [8, 1], strides = [1, 1]} : vector<8x2xf32> to vector<8x1xf32>
    %c0_1 = arith.constant 0 : index
    %c0_2 = arith.constant 0 : index
    %2 = vector.load %arg2[%c0_1, %c0_2] : memref<2x128xf32, #tpu.memory_space<vmem>>, vector<1x128xf32>
    %3 = vector.broadcast %1 : vector<8x1xf32> to vector<8x128xf32>
    %4 = vector.broadcast %2 : vector<1x128xf32> to vector<8x128xf32>
    %5 = arith.mulf %3, %4 : vector<8x128xf32>
    %6 = vector.extract_strided_slice %0 {offsets = [0, 1], sizes = [8, 1], strides = [1, 1]} : vector<8x2xf32> to vector<8x1xf32>
    %c1 = arith.constant 1 : index
    %c0_3 = arith.constant 0 : index
    %7 = vector.load %arg2[%c1, %c0_3] : memref<2x128xf32, #tpu.memory_space<vmem>>, vector<1x128xf32>
    %8 = vector.broadcast %6 : vector<8x1xf32> to vector<8x128xf32>
    %9 = vector.broadcast %7 : vector<1x128xf32> to vector<8x128xf32>
    %10 = arith.mulf %8, %9 : vector<8x128xf32>
    %11 = arith.addf %5, %10 : vector<8x128xf32>
    %c0_4 = arith.constant 0 : index
    %c0_5 = arith.constant 0 : index
    %12 = vector.load %arg3[%c0_4, %c0_5] : memref<1x128xf32, #tpu.memory_space<vmem>>, vector<1x128xf32>
    %13 = vector.broadcast %12 : vector<1x128xf32> to vector<8x128xf32>
    %14 = arith.addf %11, %13 : vector<8x128xf32>
    %cst = arith.constant 0.000000e+00 : f32
    %15 = vector.broadcast %cst : f32 to vector<8x128xf32>
    %16 = arith.maximumf %14, %15 : vector<8x128xf32>
    %c0_6 = arith.constant 0 : index
    %c0_7 = arith.constant 0 : index
    %17 = vector.load %arg4[%c0_6, %c0_7] : memref<128x128xf32, #tpu.memory_space<vmem>>, vector<128x128xf32>
    %cst_8 = arith.constant dense<0.000000e+00> : vector<8x128xf32>
    %18 = tpu.matmul %16, %17, %cst_8 {dimension_numbers = #tpu.dot_dimension_numbers<[1], [0], [0], [1], [0, 0, 1, 1], [], []>} : vector<8x128xf32>, vector<128x128xf32>, vector<8x128xf32> -> vector<8x128xf32>
    %c0_9 = arith.constant 0 : index
    %c0_10 = arith.constant 0 : index
    %19 = vector.load %arg5[%c0_9, %c0_10] : memref<1x128xf32, #tpu.memory_space<vmem>>, vector<1x128xf32>
    %20 = vector.broadcast %19 : vector<1x128xf32> to vector<8x128xf32>
    %21 = arith.addf %18, %20 : vector<8x128xf32>
    %cst_11 = arith.constant 0.000000e+00 : f32
    %22 = vector.broadcast %cst_11 : f32 to vector<8x128xf32>
    %23 = arith.maximumf %21, %22 : vector<8x128xf32>
    %c0_12 = arith.constant 0 : index
    %c0_13 = arith.constant 0 : index
    %24 = vector.load %arg6[%c0_12, %c0_13] : memref<1x128xf32, #tpu.memory_space<vmem>>, vector<1x128xf32>
    %25 = vector.broadcast %24 : vector<1x128xf32> to vector<8x128xf32>
    %26 = arith.mulf %23, %25 : vector<8x128xf32>
    %cst_14 = arith.constant dense<0.000000e+00> : vector<8xf32>
    %27 = vector.multi_reduction <add>, %26, %cst_14 [1] : vector<8x128xf32> to vector<8xf32>
    %28 = vector.shape_cast %27 : vector<8xf32> to vector<8x1xf32>
    %c0_15 = arith.constant 0 : index
    %c0_16 = arith.constant 0 : index
    %29 = vector.load %arg7[%c0_15, %c0_16] : memref<1x1xf32, #tpu.memory_space<vmem>>, vector<1x1xf32>
    %30 = vector.broadcast %29 : vector<1x1xf32> to vector<8x1xf32>
    %31 = arith.addf %28, %30 : vector<8x1xf32>
    %c0_17 = arith.constant 0 : index
    %c0_18 = arith.constant 0 : index
    %32 = vector.load %arg8[%c0_17, %c0_18] : memref<8x1xf32, #tpu.memory_space<vmem>>, vector<8x1xf32>
    tpu.vector_store %arg8[%c0_17, %c0_18], %31 {strides = array<i32>} : memref<8x1xf32, #tpu.memory_space<vmem>>, vector<8x1xf32>,
    return
  }
  func.func @transform_0(%arg0: i32) -> (i32, i32) {
    %c0_i32 = arith.constant 0 : i32
    %c0_i32_0 = arith.constant 0 : i32
    return %arg0, %c0_i32 : i32, i32
  }
  func.func @transform_1(%arg0: i32) -> (i32, i32) {
    %c0_i32 = arith.constant 0 : i32
    %c0_i32_0 = arith.constant 0 : i32
    %c0_i32_1 = arith.constant 0 : i32
    return %c0_i32, %c0_i32_0 : i32, i32
  }
  func.func @transform_2(%arg0: i32) -> (i32, i32) {
    %c0_i32 = arith.constant 0 : i32
    %c0_i32_0 = arith.constant 0 : i32
    %c0_i32_1 = arith.constant 0 : i32
    return %c0_i32, %c0_i32_0 : i32, i32
  }
  func.func @transform_3(%arg0: i32) -> (i32, i32) {
    %c0_i32 = arith.constant 0 : i32
    %c0_i32_0 = arith.constant 0 : i32
    %c0_i32_1 = arith.constant 0 : i32
    return %c0_i32, %c0_i32_0 : i32, i32
  }
  func.func @transform_4(%arg0: i32) -> (i32, i32) {
    %c0_i32 = arith.constant 0 : i32
    %c0_i32_0 = arith.constant 0 : i32
    %c0_i32_1 = arith.constant 0 : i32
    return %c0_i32, %c0_i32_0 : i32, i32
  }
  func.func @transform_5(%arg0: i32) -> (i32, i32) {
    %c0_i32 = arith.constant 0 : i32
    %c0_i32_0 = arith.constant 0 : i32
    %c0_i32_1 = arith.constant 0 : i32
    return %c0_i32, %c0_i32_0 : i32, i32
  }
  func.func @transform_6(%arg0: i32) -> (i32, i32) {
    %c0_i32 = arith.constant 0 : i32
    %c0_i32_0 = arith.constant 0 : i32
    %c0_i32_1 = arith.constant 0 : i32
    return %c0_i32, %c0_i32_0 : i32, i32
  }
  func.func @transform_7(%arg0: i32) -> (i32, i32) {
    %c0_i32 = arith.constant 0 : i32
    %c0_i32_0 = arith.constant 0 : i32
    return %arg0, %c0_i32 : i32, i32
  }
}

</mosaic_0001>

<llo_original>
// kernel: circle_model_v1_forward.1
$region0: #{circle_model_v1_forward.1}
  #allocation0 [shape = 'u32[]', space=smem, size = 0x4, offset = 0x4, fixed_abs, tag = 'smem constant byte address 0x4 - core index']
  #allocation1 [shape = 'u32[144,128]{1,0:T(1,128)}', space=vmem, size = 0x12000, scoped, tag = 'internal scratch']
  #allocation2 [shape = 'f32[1,1]{1,0:T(1,128)S(1)}', space=vmem, size = 0x200, scoped, tag = 'scoped memory for circle_model_v1_forward.1']
  %s0 = inlined_call_operand.vmem [shape: f32[8,2], index: 0, kind: input, shape index: {}]
  %s1 = inlined_call_operand.vmem [shape: f32[2,128], index: 1, kind: input, shape index: {}]
  %s2 = inlined_call_operand.vmem [shape: f32[1,128], index: 2, kind: input, shape index: {}]
  %s3 = inlined_call_operand.vmem [shape: f32[128,128], index: 3, kind: input, shape index: {}]
  %s4 = inlined_call_operand.vmem [shape: f32[1,128], index: 4, kind: input, shape index: {}]
  %s5 = inlined_call_operand.vmem [shape: f32[1,128], index: 5, kind: input, shape index: {}]
  %s6 = inlined_call_operand.<no memory space> [shape: f32[1,1], index: 6, kind: input, shape index: {}]
  %s7 = inlined_call_operand.vmem [shape: f32[8,1], index: 7, kind: output, shape index: {}]
  %s8 = sld [smem:[#allocation0]]
  $region38: #{circle_model_v1_forward.1} parent=0
    _
  %s10 = ssub.s32 1, %s8
  %s11 = scalar_select 0, %s10, %s8
  %v12 = vstv %s6
  %13 = vst [vmem:[#allocation2] sm:$0x1] %v12
  // Predicated region
  $region2: #{circle_model_v1_forward.1} parent=0 // pred_check
    _
  $region3: #{circle_model_v1_forward.1} parent=0 // pred_check_branch
    %15 = sbr.rel (0) target = $region5
  $region4: #{circle_model_v1_forward.1} parent=0 // pred_region
    _
  $region5: #{circle_model_v1_forward.1} parent=0 // pred_fallthru
    _
  // Predicated region
  $region6: #{circle_model_v1_forward.1} parent=0 // pred_check
    _
  $region7: #{circle_model_v1_forward.1} parent=0 // pred_check_branch
    %17 = sbr.rel (0) target = $region9
  $region8: #{circle_model_v1_forward.1} parent=0 // pred_region
    _
  $region9: #{circle_model_v1_forward.1} parent=0 // pred_fallthru
    _
  // Predicated region
  $region10: #{circle_model_v1_forward.1} parent=0 // pred_check
    _
  $region11: #{circle_model_v1_forward.1} parent=0 // pred_check_branch
    %19 = sbr.rel (0) target = $region13
  $region12: #{circle_model_v1_forward.1} parent=0 // pred_region
    _
  $region13: #{circle_model_v1_forward.1} parent=0 // pred_fallthru
    _
  // Predicated region
  $region14: #{circle_model_v1_forward.1} parent=0 // pred_check
    _
  $region15: #{circle_model_v1_forward.1} parent=0 // pred_check_branch
    %21 = sbr.rel (0) target = $region17
  $region16: #{circle_model_v1_forward.1} parent=0 // pred_region
    _
  $region17: #{circle_model_v1_forward.1} parent=0 // pred_fallthru
    _
  // Predicated region
  $region18: #{circle_model_v1_forward.1} parent=0 // pred_check
    _
  $region19: #{circle_model_v1_forward.1} parent=0 // pred_check_branch
    %23 = sbr.rel (0) target = $region21
  $region20: #{circle_model_v1_forward.1} parent=0 // pred_region
    _
  $region21: #{circle_model_v1_forward.1} parent=0 // pred_fallthru
    _
  // Predicated region
  $region22: #{circle_model_v1_forward.1} parent=0 // pred_check
    _
  $region23: #{circle_model_v1_forward.1} parent=0 // pred_check_branch
    %25 = sbr.rel (0) target = $region25
  $region24: #{circle_model_v1_forward.1} parent=0 // pred_region
    _
  $region25: #{circle_model_v1_forward.1} parent=0 // pred_fallthru
    _
  // Predicated region
  $region26: #{circle_model_v1_forward.1} parent=0 // pred_check
    _
  $region27: #{circle_model_v1_forward.1} parent=0 // pred_check_branch
    %27 = sbr.rel (0) target = $region29
  $region28: #{circle_model_v1_forward.1} parent=0 // pred_region
    _
  $region29: #{circle_model_v1_forward.1} parent=0 // pred_fallthru
    _
  %v28 = vld [vmem:[%s0] sm:$0xff]
  %v29 = vld [vmem:[%s1] sm:$0x1]
  %31 = vset.pattern.permute.xlu0 0
  %32 = vperm.xlu0 %31, %v28
  %v33 = vpop.permute.xlu0 %32
  %v35 = vlaneseq
  %v36 = vshrl.u32 %v35, 7
  %v37 = vsub.s32 0, %v36
  %v38 = vrot.slane %v29, %v37
  %v39 = vmul.f32 %v33, %v38
  %v40 = vld [vmem:[%s1 + $0x1] sm:$0x1]
  %41 = vset.pattern.permute.xlu0 1
  %42 = vperm.xlu0 %41, %v28
  %v43 = vpop.permute.xlu0 %42
  %v45 = vlaneseq
  %v46 = vshrl.u32 %v45, 7
  %v47 = vsub.s32 0, %v46
  %v48 = vrot.slane %v40, %v47
  %v49 = vmul.f32 %v43, %v48
  %v50 = vadd.f32 %v39, %v49
  %v51 = vld [vmem:[%s2] sm:$0x1]
  %v53 = vlaneseq
  %v54 = vshrl.u32 %v53, 7
  %v55 = vsub.s32 0, %v54
  %v56 = vrot.slane %v51, %v55
  %v58 = vadd.f32 %v50, %v56
  %v59 = vmax.f32 %v58, 0.0
  %v60 = vld [vmem:[%s3] sm:$0xff]
  %v61 = vld [vmem:[%s3 + $0x8] sm:$0xff]
  %v62 = vld [vmem:[%s3 + $0x10] sm:$0xff]
  %v63 = vld [vmem:[%s3 + $0x18] sm:$0xff]
  %v64 = vld [vmem:[%s3 + $0x20] sm:$0xff]
  %v65 = vld [vmem:[%s3 + $0x28] sm:$0xff]
  %v66 = vld [vmem:[%s3 + $0x30] sm:$0xff]
  %v67 = vld [vmem:[%s3 + $0x38] sm:$0xff]
  %v68 = vld [vmem:[%s3 + $0x40] sm:$0xff]
  %v69 = vld [vmem:[%s3 + $0x48] sm:$0xff]
  %v70 = vld [vmem:[%s3 + $0x50] sm:$0xff]
  %v71 = vld [vmem:[%s3 + $0x58] sm:$0xff]
  %v72 = vld [vmem:[%s3 + $0x60] sm:$0xff]
  %v73 = vld [vmem:[%s3 + $0x68] sm:$0xff]
  %v74 = vld [vmem:[%s3 + $0x70] sm:$0xff]
  %v75 = vld [vmem:[%s3 + $0x78] sm:$0xff]
  %v76 = vld [vmem:[%s4] sm:$0x1]
  %v78 = vlaneseq
  %v79 = vshrl.u32 %v78, 7
  %v80 = vsub.s32 0, %v79
  %v81 = vrot.slane %v76, %v80
  %83 = vmatprep.subr.mxu0 0.0
  %84 = vmatpush1.msra.mxu0 %v75
  %85 = vmatprep.subr.mxu0 0.0
  %86 = vmatpush1.msra.mxu0 %v74
  %87 = vmatprep.subr.mxu0 0.0
  %88 = vmatpush1.msra.mxu0 %v73
  %89 = vmatprep.subr.mxu0 0.0
  %90 = vmatpush1.msra.mxu0 %v72
  %91 = vmatprep.subr.mxu0 0.0
  %92 = vmatpush1.msra.mxu0 %v71
  %93 = vmatprep.subr.mxu0 0.0
  %94 = vmatpush1.msra.mxu0 %v70
  %95 = vmatprep.subr.mxu0 0.0
  %96 = vmatpush1.msra.mxu0 %v69
  %97 = vmatprep.subr.mxu0 0.0
  %98 = vmatpush1.msra.mxu0 %v68
  %99 = vmatprep.subr.mxu0 0.0
  %100 = vmatpush1.msra.mxu0 %v67
  %101 = vmatprep.subr.mxu0 0.0
  %102 = vmatpush1.msra.mxu0 %v66
  %103 = vmatprep.subr.mxu0 0.0
  %104 = vmatpush1.msra.mxu0 %v65
  %105 = vmatprep.subr.mxu0 0.0
  %106 = vmatpush1.msra.mxu0 %v64
  %107 = vmatprep.subr.mxu0 0.0
  %108 = vmatpush1.msra.mxu0 %v63
  %109 = vmatprep.subr.mxu0 0.0
  %110 = vmatpush1.msra.mxu0 %v62
  %111 = vmatprep.subr.mxu0 0.0
  %112 = vmatpush1.msra.mxu0 %v61
  %113 = vmatprep.subr.mxu0 0.0
  %114 = vmatpush1.msra.mxu0 %v60
  %115 = vmatprep.subr.mxu0 0.0
  %116 = vmatpush2.msra.mxu0 0.0
  %117 = vmatprep.subr.mxu0 0.0
  %118 = vmatpush2.msra.mxu0 0.0
  %119 = vmatprep.subr.mxu0 0.0
  %120 = vmatpush2.msra.mxu0 0.0
  %121 = vmatprep.subr.mxu0 0.0
  %122 = vmatpush2.msra.mxu0 0.0
  %123 = vmatprep.subr.mxu0 0.0
  %124 = vmatpush2.msra.mxu0 0.0
  %125 = vmatprep.subr.mxu0 0.0
  %126 = vmatpush2.msra.mxu0 0.0
  %127 = vmatprep.subr.mxu0 0.0
  %128 = vmatpush2.msra.mxu0 0.0
  %129 = vmatprep.subr.mxu0 0.0
  %130 = vmatpush2.msra.mxu0 0.0
  %131 = vmatprep.subr.mxu0 0.0
  %132 = vmatpush2.msra.mxu0 0.0
  %133 = vmatprep.subr.mxu0 0.0
  %134 = vmatpush2.msra.mxu0 0.0
  %135 = vmatprep.subr.mxu0 0.0
  %136 = vmatpush2.msra.mxu0 0.0
  %137 = vmatprep.subr.mxu0 0.0
  %138 = vmatpush2.msra.mxu0 0.0
  %139 = vmatprep.subr.mxu0 0.0
  %140 = vmatpush2.msra.mxu0 0.0
  %141 = vmatprep.subr.mxu0 0.0
  %142 = vmatpush2.msra.mxu0 0.0
  %143 = vmatprep.subr.mxu0 0.0
  %144 = vmatpush2.msra.mxu0 0.0
  %145 = vmatprep.subr.mxu0 0.0
  %146 = vmatpush2.msra.mxu0 0.0
  %147 = vmatprep.mubr.f32.mxu0 0.0
  %148 = vmatmul.mubr.f32.gmra.mxu0 %v59
  %v149 = vpop.f32.mrf.mxu0
  %v150 = vadd.f32 %v81, %v149
  %v151 = vpop.f32.mrf.mxu0
  %152 = vdwg.mxu0
  %v153 = vmax.f32 %v150, 0.0
  %v154 = vld [vmem:[%s5] sm:$0x1]
  %v156 = vlaneseq
  %v157 = vshrl.u32 %v156, 7
  %v158 = vsub.s32 0, %v157
  %v159 = vrot.slane %v154, %v158
  %v161 = vmul.f32 %v153, %v159
  %162 = vadd.xlane.f32.xlu0 %v161
  %v163 = vpop.xlane.xlu0 %162
  %v164 = vld [vmem:[#allocation2] sm:$0x1]
  %v166 = vlaneseq
  %v167 = vshrl.u32 %v166, 7
  %v168 = vsub.s32 0, %v167
  %v169 = vrot.slane %v164, %v168
  %v171 = vadd.f32 %v163, %v169
  %vm172 = vcmask 7168
  %173 = vst.msk [vmem:[%s7] sm:$0xff] %vm172, %v171
  // Predicated region
  $region30: #{circle_model_v1_forward.1} parent=0 // pred_check
    _
  $region31: #{circle_model_v1_forward.1} parent=0 // pred_check_branch
    %175 = sbr.rel (0) target = $region33
  $region32: #{circle_model_v1_forward.1} parent=0 // pred_region
    _
  $region33: #{circle_model_v1_forward.1} parent=0 // pred_fallthru
    _
  // Predicated region
  $region34: #{circle_model_v1_forward.1} parent=0 // pred_check
    _
  $region35: #{circle_model_v1_forward.1} parent=0 // pred_check_branch
    %177 = sbr.rel (0) target = $region37
  $region36: #{circle_model_v1_forward.1} parent=0 // pred_region
    _
  $region37: #{circle_model_v1_forward.1} parent=0 // pred_fallthru
    _

</llo_original>
